<compile_context>
chip_gen: v7x
topology: tpu7x:2x2x1
jax: 0.10.0
libtpu: 0.0.40
codegen_flags: <defaults>
</compile_context>

<pallas_src>
import functools

import jax
import jax.numpy as jnp
from jax.experimental import pallas as pl
from jax.experimental.pallas import tpu as pltpu


# ---------------------------------------------------------------------------
# Kernel
# ---------------------------------------------------------------------------
def _simam_kernel(x_ref, o_ref, *, inv_n, e_lambda, inv_hw, hw_real, force_f32):
    # x_ref: (tile_rows, hw_padded) tile in VMEM. Each row = one (b, c) plane.
    x_in = x_ref[...]

    if force_f32 or x_in.dtype != jnp.bfloat16:
        compute_dtype = jnp.float32
    else:
        compute_dtype = jnp.bfloat16
    x = x_in.astype(compute_dtype)

    # Row-wise mean over the *real* HW lanes. Padding lanes are zero, so the
    # raw lane sum already equals the sum over real lanes; scale by 1/HW.
    # Accumulate in f32 for accuracy.
    mu_f32 = jnp.sum(x.astype(jnp.float32), axis=-1, keepdims=True) * inv_hw
    d = x - mu_f32.astype(compute_dtype)
    d2 = d * d  # (x - mu)^2

    # Row-wise sum of squares (f32 accumulation). Padding lanes hold
    # d2 = mu^2, so mask them out (only when padding is actually present).
    hw_padded = x_in.shape[-1]
    d2_f32 = d2.astype(jnp.float32)
    if hw_padded != hw_real:
        lane = jax.lax.broadcasted_iota(jnp.int32, x_in.shape, x_in.ndim - 1)
        d2_f32 = jnp.where(lane < hw_real, d2_f32, 0.0)
    s = jnp.sum(d2_f32, axis=-1, keepdims=True)

    # y = d2 / (4 * (s / n + e_lambda)) + 0.5  (one exact reciprocal per row)
    denom = 4.0 * (s * inv_n + e_lambda)                 # (tile_rows, 1) f32
    inv_denom = pl.reciprocal(denom, approx=False).astype(compute_dtype)

    y = d2 * inv_denom + jnp.asarray(0.5, compute_dtype)

    # y >= 0.5 > 0 always -> one-sided sigmoid, no stable-select / extra exp.
    # exp(-y) <= exp(-0.5) so no overflow. Exact reciprocal for f32 compute;
    # fast EUP reciprocal is plenty for the bf16 attention gate.
    one = jnp.asarray(1.0, compute_dtype)
    attn = pl.reciprocal(one + jnp.exp(-y),
                         approx=(compute_dtype == jnp.bfloat16))

    o_ref[...] = (x * attn).astype(o_ref.dtype)


# ---------------------------------------------------------------------------
# Tiling / VMEM heuristics
# ---------------------------------------------------------------------------
def _chip_flags():
    """(is_v5e, is_v7x) from the device kind string; conservative fallback."""
    kind = ""
    try:
        kind = jax.devices()[0].device_kind.lower()
    except Exception:
        pass
    is_v5e = ("v5 lite" in kind) or ("v5e" in kind) or ("v5litepod" in kind)
    is_v7 = "v7" in kind
    return is_v5e, is_v7


def _vmem_plan():
    """(scoped_vmem_limit_bytes, pipeline+intermediate budget bytes)."""
    mib = 1024 * 1024
    try:
        cap = int(pltpu.get_tpu_info().vmem_capacity_bytes)
    except Exception:
        cap = 128 * mib
    if cap <= 80 * mib:          # v7x-class: 64 MiB physical per TensorCore
        scoped = 40 * mib
    else:                        # v5e / v6e: 128 MiB physical
        scoped = 64 * mib
    budget = (scoped * 3) // 4   # headroom inside the scoped limit
    return scoped, budget


def _pick_tile_rows(rows, hw, in_itemsize, budget_bytes, num_cores):
    """Largest legal row tile under the VMEM budget, byte-capped per block."""
    # Per-row VMEM cost:
    #  * pipeline buffers: (in + out) x double-buffer -> 4 * hw * in_itemsize
    #  * full-tile intermediates (x/d/d2 + the f32 reduction temps created by
    #    the astype(f32) casts) -> conservatively ~4 full tiles of f32.
    pipeline_per_row = 4 * hw * in_itemsize
    interm_per_row = 4 * hw * 4
    per_row = pipeline_per_row + interm_per_row

    tile = max(budget_bytes // per_row, 1)

    # Byte cap on the *input* block (~8 MiB): past ~4-8 MiB/block the HBM
    # roofline plateau is reached; larger only burns VMEM. (Replaces the old
    # fixed 2048-row cap, which left small-HW blocks far below the plateau.)
    in_block_cap_rows = (8 * 1024 * 1024) // max(hw * in_itemsize, 1)
    tile = min(tile, max(in_block_cap_rows, 1))

    # Multi-TensorCore chips (v7x): make sure the "parallel" grid axis has at
    # least `num_cores` steps so both cores get work.
    if num_cores > 1 and rows >= num_cores * 8:
        tile = min(tile, (rows + num_cores - 1) // num_cores)

    if tile >= rows or rows <= 8:
        return rows                         # full extent: always legal
    return max(8, (tile // 8) * 8)          # f32 sublane multiple
    # TODO(synk): if a single (8, HW) row tile ever exceeds the budget
    # (~1M+ element planes), switch to a two-pass / chunked-HW scheme with
    # f32 mu/s accumulators in VMEM scratch instead of overshooting here.


# ---------------------------------------------------------------------------
# Wrapper
# ---------------------------------------------------------------------------
def simam(x, e_lambda=1e-4):
    """SimAM forward. x: (B, C, H, W) array. Returns same shape/dtype."""
    b, c, h, w = x.shape
    hw = h * w
    rows = b * c
    n = float(hw - 1)
    inv_n = (1.0 / n) if n > 0.0 else float("inf")   # matches PyTorch (hw==1)

    x2d = x.reshape(rows, hw)

    # Lane-dense padding: round HW up to a multiple of 128 so every vreg op
    # and store is unmasked. Pad lanes are zeros; the kernel masks them out
    # of the variance sum, and we slice them off afterwards.
    lanes = 128
    hw_padded = ((hw + lanes - 1) // lanes) * lanes
    if hw_padded != hw:
        x2d = jnp.pad(x2d, ((0, 0), (0, hw_padded - hw)))

    is_v5e, is_v7 = _chip_flags()
    scoped_vmem, budget = _vmem_plan()
    num_cores = 2 if is_v7 else 1

    in_itemsize = jnp.dtype(x.dtype).itemsize
    tile_rows = _pick_tile_rows(rows, hw_padded, in_itemsize, budget, num_cores)
    # cdiv grid: rows of the (possibly partial) last block that fall outside
    # the array are computed but never written back (rows are independent).
    grid = (pl.cdiv(rows, tile_rows),)

    kernel = functools.partial(
        _simam_kernel,
        inv_n=inv_n,
        e_lambda=float(e_lambda),
        inv_hw=1.0 / hw,
        hw_real=hw,
        force_f32=is_v5e,   # v5e has no bf16 VPU/EUP datapath
    )

    out2d = pl.pallas_call(
        kernel,
        out_shape=jax.ShapeDtypeStruct((rows, hw_padded), x.dtype),
        grid_spec=pltpu.PrefetchScalarGridSpec(
            num_scalar_prefetch=0,
            grid=grid,
            in_specs=[pl.BlockSpec((tile_rows, hw_padded), lambda i: (i, 0))],
            out_specs=pl.BlockSpec((tile_rows, hw_padded), lambda i: (i, 0)),
        ),
        compiler_params=pltpu.CompilerParams(
            dimension_semantics=("parallel",),
            vmem_limit_bytes=scoped_vmem,
        ),
    )(x2d)

    if hw_padded != hw:
        out2d = out2d[:, :hw]
    return out2d.reshape(b, c, h, w)


# ---------------------------------------------------------------------------
# Pure-JAX reference (matches the PyTorch forward exactly)
# ---------------------------------------------------------------------------
def simam_reference(x, e_lambda=1e-4):
    b, c, h, w = x.shape
    n = w * h - 1
    mu = jnp.mean(x, axis=(2, 3), keepdims=True)
    d2 = (x - mu) ** 2
    y = d2 / (4.0 * (jnp.sum(d2, axis=(2, 3), keepdims=True) / n + e_lambda)) + 0.5
    return x * jax.nn.sigmoid(y)


if __name__ == "__main__":
    key = jax.random.PRNGKey(0)

    # Main case: lane-dense HW (16*16 = 256), rows = 8.
    B, C, H, W = 2, 4, 16, 16
    x = jax.random.normal(key, (B, C, H, W), dtype=jnp.float32)
    out = jax.block_until_ready(simam(x))
    ref = simam_reference(x)
    assert out.shape == (B, C, H, W)
    assert out.dtype == x.dtype
    assert jnp.allclose(out, ref, atol=1e-5, rtol=1e-5), "mismatch vs reference"

    # Secondary case: HW not a multiple of 128 (7x7 -> padded to 128 lanes)
    # and rows not a multiple of 8 — exercises the pad-lane masking path.
    key2 = jax.random.PRNGKey(0)
    x2 = jax.random.normal(key2, (3, 5, 7, 7), dtype=jnp.float32)
    out2 = jax.block_until_ready(simam(x2))
    ref2 = simam_reference(x2)
    assert jnp.allclose(out2, ref2, atol=1e-5, rtol=1e-5), "mismatch (padded HW)"

    print("KERNEL_OK")
</pallas_src>

<mosaic_0001>
module attributes {stable_mosaic.version = 11 : i64} {
  func.func @_simam_kernel(%arg0: i32, %arg1: memref<8x256xf32, #tpu.memory_space<vmem>>, %arg2: memref<8x256xf32, #tpu.memory_space<vmem>>) attributes {dimension_semantics = [#tpu.dimension_semantics<parallel>], iteration_bounds = array<i64: 1>, scalar_prefetch = 0 : i64, scratch_operands = 0 : i64, tpu.core_type = #tpu.core_type<tc>, window_params = [{transform_indices = @transform_0, window_bounds = array<i64: 8, 256>}, {transform_indices = @transform_1, window_bounds = array<i64: 8, 256>}]} {
    %c0 = arith.constant 0 : index
    %c0_0 = arith.constant 0 : index
    %0 = vector.load %arg1[%c0, %c0_0] : memref<8x256xf32, #tpu.memory_space<vmem>>, vector<8x256xf32>
    %cst = arith.constant dense<0.000000e+00> : vector<8xf32>
    %1 = vector.multi_reduction <add>, %0, %cst [1] : vector<8x256xf32> to vector<8xf32>
    %2 = vector.shape_cast %1 : vector<8xf32> to vector<8x1xf32>
    %cst_1 = arith.constant 3.906250e-03 : f32
    %3 = vector.broadcast %cst_1 : f32 to vector<8x1xf32>
    %4 = arith.mulf %2, %3 : vector<8x1xf32>
    %5 = vector.broadcast %4 : vector<8x1xf32> to vector<8x256xf32>
    %6 = arith.subf %0, %5 : vector<8x256xf32>
    %7 = arith.mulf %6, %6 : vector<8x256xf32>
    %cst_2 = arith.constant dense<0.000000e+00> : vector<8xf32>
    %8 = vector.multi_reduction <add>, %7, %cst_2 [1] : vector<8x256xf32> to vector<8xf32>
    %9 = vector.shape_cast %8 : vector<8xf32> to vector<8x1xf32>
    %cst_3 = arith.constant 0.00392156886 : f32
    %10 = vector.broadcast %cst_3 : f32 to vector<8x1xf32>
    %11 = arith.mulf %9, %10 : vector<8x1xf32>
    %cst_4 = arith.constant 9.99999974E-5 : f32
    %12 = vector.broadcast %cst_4 : f32 to vector<8x1xf32>
    %13 = arith.addf %11, %12 : vector<8x1xf32>
    %cst_5 = arith.constant 4.000000e+00 : f32
    %14 = vector.broadcast %cst_5 : f32 to vector<8x1xf32>
    %15 = arith.mulf %14, %13 : vector<8x1xf32>
    %16 = tpu.reciprocal %15 : vector<8x1xf32> -> vector<8x1xf32>
    %17 = vector.broadcast %16 : vector<8x1xf32> to vector<8x256xf32>
    %18 = arith.mulf %7, %17 : vector<8x256xf32>
    %cst_6 = arith.constant 5.000000e-01 : f32
    %19 = vector.broadcast %cst_6 : f32 to vector<8x256xf32>
    %20 = arith.addf %18, %19 : vector<8x256xf32>
    %cst_7 = arith.constant 0.000000e+00 : f32
    %21 = vector.broadcast %cst_7 : f32 to vector<8x256xf32>
    %22 = arith.subf %21, %20 : vector<8x256xf32>
    %23 = math.exp %22 : vector<8x256xf32>
    %cst_8 = arith.constant 1.000000e+00 : f32
    %24 = vector.broadcast %cst_8 : f32 to vector<8x256xf32>
    %25 = arith.addf %24, %23 : vector<8x256xf32>
    %26 = tpu.reciprocal %25 : vector<8x256xf32> -> vector<8x256xf32>
    %27 = arith.mulf %0, %26 : vector<8x256xf32>
    %c0_9 = arith.constant 0 : index
    %c0_10 = arith.constant 0 : index
    %28 = vector.load %arg2[%c0_9, %c0_10] : memref<8x256xf32, #tpu.memory_space<vmem>>, vector<8x256xf32>
    tpu.vector_store %arg2[%c0_9, %c0_10], %27 {strides = array<i32>} : memref<8x256xf32, #tpu.memory_space<vmem>>, vector<8x256xf32>,
    return
  }
  func.func @transform_0(%arg0: i32) -> (i32, i32) {
    %c0_i32 = arith.constant 0 : i32
    %c0_i32_0 = arith.constant 0 : i32
    return %arg0, %c0_i32 : i32, i32
  }
  func.func @transform_1(%arg0: i32) -> (i32, i32) {
    %c0_i32 = arith.constant 0 : i32
    %c0_i32_0 = arith.constant 0 : i32
    return %arg0, %c0_i32 : i32, i32
  }
}

</mosaic_0001>

<llo_original>
// kernel: tpu_custom_call.1
$region0: #{tpu_custom_call.1}
  #allocation0 [shape = 'u32[]', space=smem, size = 0x4, offset = 0x4, fixed_abs, tag = 'smem constant byte address 0x4 - core index']
  #allocation1 [shape = 'u32[144,128]{1,0:T(1,128)}', space=vmem, size = 0x12000, scoped, tag = 'internal scratch']
  %s0 = inlined_call_operand.hbm [shape: f32[8,256], index: 0, kind: input, shape index: {}]
  %s1 = inlined_call_operand.hbm [shape: f32[8,256], index: 1, kind: output, shape index: {}]
  %s2 = sld [smem:[#allocation0]]
  $region18: #{tpu_custom_call.1} parent=0
    _
  %s4 = ssub.s32 1, %s2
  %s5 = scalar_select 0, %s4, %s2
  $region1: #{tpu_custom_call.1} parent=0
    #allocation2 [shape = 'u8[8192]{0}', space=vmem, size = 0x2000, scoped, tag = 'input window, operand 0, single buffered']
    #allocation3 [shape = 's32[1]{0}', space=sflag, size = 0x4, scoped, tag = 'scoped memory for tpu_custom_call.1']
    #allocation4 [shape = 's32[1]{0}', space=sflag, size = 0x4, scoped, tag = 'scoped memory for tpu_custom_call.1']
    #allocation5 [shape = 'u8[8192]{0}', space=vmem, size = 0x2000, scoped, tag = 'output window, operand 0, single buffered']
    %6 = vsyncpa [#allocation3], 0
    %7 = vsyncpa [#allocation4], 0
    // Predicated region
    $region2: #{tpu_custom_call.1} parent=1 // pred_check
      _
    $region3: #{tpu_custom_call.1} parent=1 // pred_check_branch
      %9 = sbr.rel (0) target = $region5
    $region4: #{tpu_custom_call.1} parent=1 // pred_region
      %s11 = ssub.s32 256, 256
      %12 = vsyncadd [#allocation3], %s11
      %s14 = sshll.u32 [#allocation2], 4
      %s15 = int_to_ptr.vmem [resolvable:$true] %s14
      %17 = dma.hbm_to_vmem [thread:$0]  %s0, 256, %s15, [#allocation3]
    $region5: #{tpu_custom_call.1} parent=1 // pred_fallthru
      _
    // Predicated region
    $region6: #{tpu_custom_call.1} parent=1 // pred_check
      _
    $region7: #{tpu_custom_call.1} parent=1 // pred_check_branch
      %19 = sbr.rel (0) target = $region9
    $region8: #{tpu_custom_call.1} parent=1 // pred_region
      %20 = dma.done [#allocation3], 256
    $region9: #{tpu_custom_call.1} parent=1 // pred_fallthru
      _
    %v21 = vld [vmem:[#allocation2] sm:$0xff]
    %v22 = vld [vmem:[#allocation2 + $0x8] sm:$0xff]
    %v23 = vadd.f32 %v21, %v22
    %24 = vadd.xlane.f32.xlu0 %v23
    %v25 = vpop.xlane.xlu0 %24
    %v26 = vmul.f32 %v25, 0.00390625
    %v27 = vsub.f32 %v21, %v26
    %v28 = vsub.f32 %v22, %v26
    %v29 = vmul.f32 %v27, %v27
    %v30 = vmul.f32 %v28, %v28
    %v31 = vadd.f32 %v29, %v30
    %32 = vadd.xlane.f32.xlu0 %v31
    %v33 = vpop.xlane.xlu0 %32
    %v34 = vmul.f32 %v33, 0.003921569
    %v35 = vadd.f32 %v34, 0.0001
    %v36 = vmul.f32 %v35, 4.0
    %v37 = vrcp.pop %v36
    %v38 = vmul.f32 %v29, %v37
    %v39 = vmul.f32 %v30, %v37
    %v40 = vadd.f32 %v38, 0.5
    %v41 = vadd.f32 %v39, 0.5
    %v42 = vsub.f32 0.0, %v40
    %v43 = vsub.f32 0.0, %v41
    %v44 = vmul.f32 %v42, 1.442695
    %v45 = vpow.pop %v44
    %v46 = vmul.f32 %v43, 1.442695
    %v47 = vpow.pop %v46
    %v48 = vadd.f32 %v45, 1.0
    %v49 = vadd.f32 %v47, 1.0
    %v50 = vrcp.pop %v48
    %v51 = vrcp.pop %v49
    %v52 = vmul.f32 %v21, %v50
    %v53 = vmul.f32 %v22, %v51
    %54 = vst [vmem:[#allocation5] sm:$0xff] %v52
    %55 = vst [vmem:[#allocation5 + $0x8] sm:$0xff] %v53
    // Predicated region
    $region10: #{tpu_custom_call.1} parent=1 // pred_check
      _
    $region11: #{tpu_custom_call.1} parent=1 // pred_check_branch
      %57 = sbr.rel (0) target = $region13
    $region12: #{tpu_custom_call.1} parent=1 // pred_region
      %s59 = ssub.s32 256, 256
      %60 = vsyncadd [#allocation4], %s59
      %s62 = sshll.u32 [#allocation5], 4
      %s63 = int_to_ptr.vmem [resolvable:$true] %s62
      %65 = dma.vmem_to_hbm [thread:$0]  %s63, 256, %s1, [#allocation4]
    $region13: #{tpu_custom_call.1} parent=1 // pred_fallthru
      _
    // Predicated region
    $region14: #{tpu_custom_call.1} parent=1 // pred_check
      _
    $region15: #{tpu_custom_call.1} parent=1 // pred_check_branch
      %67 = sbr.rel (0) target = $region17
    $region16: #{tpu_custom_call.1} parent=1 // pred_region
      %68 = dma.done [#allocation4], 256
    $region17: #{tpu_custom_call.1} parent=1 // pred_fallthru
      _
    %69 = vsyncpa [#allocation3], 1
    %70 = vsyncpa [#allocation4], 1

</llo_original>
